<compile_context>
chip_gen: v6e
topology: v6e:2x2x1
jax: 0.10.0
libtpu: 0.0.40
codegen_flags: <defaults>
</compile_context>

<pallas_src>
import jax
import jax.numpy as jnp
from jax.experimental import pallas as pl
from jax.experimental.pallas import tpu as pltpu


def critic_kernel(x_ref, w_ref, o_ref, *, state_dim):
    # x_ref: (B, S)       state
    # w_ref: (S + O, H)   rows [0:S] = l1.weight^T (native (K, N) MXU layout),
    #                     rows [S:S+O] = l2.weight (lane-dense (O, H) rows)
    # o_ref: (B, O)       softmax over dim=0 of the logits
    x = x_ref[...]                              # (B, S)
    w1t = w_ref[:state_dim, :]                  # (S, H)  static ref slice
    w2_row = w_ref[state_dim:state_dim + 1, :]  # (1, H)  static ref slice

    # First linear on the MXU: (B, S) @ (S, H) -> (B, H), f32 accumulate.
    h = jnp.dot(x, w1t, preferred_element_type=jnp.float32)
    h = jnp.maximum(h, 0.0)  # ReLU (VPU)

    # Second linear: O == 1, so skip the MXU — VPU mul + lane reduce.
    logits = jnp.sum(h * w2_row, axis=-1, keepdims=True)   # (B, 1)

    # Numerically stable softmax over dim=0 (the batch axis). Exact divide:
    # the denominator is one scalar, so approx reciprocal buys nothing.
    m = jnp.max(logits, axis=0, keepdims=True)
    e = jnp.exp(logits - m)
    s = jnp.sum(e, axis=0, keepdims=True)
    o_ref[...] = (e / s).astype(o_ref.dtype)


def critic_forward(state, w1, w2):
    """state: (B, state_dim); w1: (hidden, state_dim); w2: (out, hidden).

    Weights are prepped once in the wrapper (transpose + pack, constant-
    foldable under jit) so the kernel sees 2 input DMAs and a native-layout
    MXU operand. Single whole-array VMEM invocation, no grid.
    """
    B, S = state.shape
    O, H = w2.shape
    assert w1.shape == (H, S)
    assert O == 1, "VPU mul+lane-sum path assumes output_dim == 1"

    # One-time weight prep: (S, H) w1^T stacked over (O, H) w2 -> (S + O, H).
    wbuf = jnp.concatenate([w1.T, w2], axis=0)

    import functools
    kernel = functools.partial(critic_kernel, state_dim=S)

    return pl.pallas_call(
        kernel,
        out_shape=jax.ShapeDtypeStruct((B, O), jnp.float32),
        in_specs=[
            pl.BlockSpec(memory_space=pltpu.MemorySpace.VMEM),
            pl.BlockSpec(memory_space=pltpu.MemorySpace.VMEM),
        ],
        out_specs=pl.BlockSpec(memory_space=pltpu.MemorySpace.VMEM),
    )(state, wbuf)


if __name__ == "__main__":
    # Small, deterministic problem sizes consistent with the module defaults.
    batch = 8
    state_dim = 16
    hidden_dim = 20
    output_dim = 1

    key = jax.random.PRNGKey(0)
    k_x, k_w1, k_w2 = jax.random.split(key, 3)

    state = jax.random.normal(k_x, (batch, state_dim), dtype=jnp.float32)
    # Deterministic uniform init matching nn.Linear(bias=False) weight shapes.
    bound1 = 1.0 / (state_dim ** 0.5)
    bound2 = 1.0 / (hidden_dim ** 0.5)
    w1 = jax.random.uniform(k_w1, (hidden_dim, state_dim), jnp.float32,
                            -bound1, bound1)
    w2 = jax.random.uniform(k_w2, (output_dim, hidden_dim), jnp.float32,
                            -bound2, bound2)

    out = critic_forward(state, w1, w2)
    out = jax.block_until_ready(out)

    # Pure-JAX reference (same semantics as the PyTorch forward, bias=False).
    ref_h = jnp.maximum(state @ w1.T, 0.0)
    ref_logits = ref_h @ w2.T
    ref = jax.nn.softmax(ref_logits, axis=0)
    assert out.shape == (batch, output_dim)
    # Exact divide in the kernel -> tight tolerance again.
    assert jnp.allclose(out, ref, atol=1e-6, rtol=1e-5)
    # Probabilities sum to 1 along dim=0.
    assert jnp.allclose(jnp.sum(out, axis=0), 1.0, atol=1e-6)

    print("KERNEL_OK")
</pallas_src>

<mosaic_0001>
module attributes {stable_mosaic.version = 11 : i64} {
  func.func @critic_kernel(%arg0: memref<8x16xf32, #tpu.memory_space<vmem>>, %arg1: memref<17x20xf32, #tpu.memory_space<vmem>>, %arg2: memref<8x1xf32, #tpu.memory_space<vmem>>) attributes {dimension_semantics = [], scalar_prefetch = 0 : i64, scratch_operands = 0 : i64, tpu.core_type = #tpu.core_type<tc>} {
    %c0 = arith.constant 0 : index
    %c0_0 = arith.constant 0 : index
    %0 = vector.load %arg0[%c0, %c0_0] : memref<8x16xf32, #tpu.memory_space<vmem>>, vector<8x16xf32>
    %c0_1 = arith.constant 0 : index
    %c0_2 = arith.constant 0 : index
    %1 = vector.load %arg1[%c0_1, %c0_2] : memref<17x20xf32, #tpu.memory_space<vmem>>, vector<16x20xf32>
    %c16 = arith.constant 16 : index
    %c0_3 = arith.constant 0 : index
    %2 = vector.load %arg1[%c16, %c0_3] : memref<17x20xf32, #tpu.memory_space<vmem>>, vector<1x20xf32>
    %cst = arith.constant dense<0.000000e+00> : vector<8x20xf32>
    %3 = tpu.matmul %0, %1, %cst {dimension_numbers = #tpu.dot_dimension_numbers<[1], [0], [0], [1], [0, 0, 1, 1], [], []>} : vector<8x16xf32>, vector<16x20xf32>, vector<8x20xf32> -> vector<8x20xf32>
    %cst_4 = arith.constant 0.000000e+00 : f32
    %4 = vector.broadcast %cst_4 : f32 to vector<8x20xf32>
    %5 = arith.maximumf %3, %4 : vector<8x20xf32>
    %6 = vector.broadcast %2 : vector<1x20xf32> to vector<8x20xf32>
    %7 = arith.mulf %5, %6 : vector<8x20xf32>
    %cst_5 = arith.constant dense<0.000000e+00> : vector<8xf32>
    %8 = vector.multi_reduction <add>, %7, %cst_5 [1] : vector<8x20xf32> to vector<8xf32>
    %9 = vector.shape_cast %8 : vector<8xf32> to vector<8x1xf32>
    %cst_6 = arith.constant dense<0xFF800000> : vector<1xf32>
    %10 = vector.multi_reduction <maximumf>, %9, %cst_6 [0] : vector<8x1xf32> to vector<1xf32>
    %11 = vector.shape_cast %10 : vector<1xf32> to vector<1x1xf32>
    %12 = vector.broadcast %11 : vector<1x1xf32> to vector<8x1xf32>
    %13 = arith.subf %9, %12 : vector<8x1xf32>
    %14 = math.exp %13 : vector<8x1xf32>
    %cst_7 = arith.constant dense<0.000000e+00> : vector<1xf32>
    %15 = vector.multi_reduction <add>, %14, %cst_7 [0] : vector<8x1xf32> to vector<1xf32>
    %16 = vector.shape_cast %15 : vector<1xf32> to vector<1x1xf32>
    %17 = vector.broadcast %16 : vector<1x1xf32> to vector<8x1xf32>
    %18 = arith.divf %14, %17 : vector<8x1xf32>
    %c0_8 = arith.constant 0 : index
    %c0_9 = arith.constant 0 : index
    %19 = vector.load %arg2[%c0_8, %c0_9] : memref<8x1xf32, #tpu.memory_space<vmem>>, vector<8x1xf32>
    tpu.vector_store %arg2[%c0_8, %c0_9], %18 {strides = array<i32>} : memref<8x1xf32, #tpu.memory_space<vmem>>, vector<8x1xf32>,
    return
  }
}

</mosaic_0001>

<llo_original>
// kernel: tpu_custom_call.1
$region0: #{tpu_custom_call.1}
  #allocation0 [shape = 'u32[]', space=smem, size = 0x4, offset = 0x4, fixed_abs, tag = 'smem constant byte address 0x4 - core index']
  #allocation1 [shape = 'u32[144,128]{1,0:T(1,128)}', space=vmem, size = 0x12000, scoped, tag = 'internal scratch']
  %s0 = inlined_call_operand.hbm [shape: f32[8,16], index: 0, kind: input, shape index: {}]
  %s1 = inlined_call_operand.hbm [shape: f32[17,20], index: 1, kind: input, shape index: {}]
  %s2 = inlined_call_operand.vmem [shape: f32[8,1], index: 2, kind: output, shape index: {}]
  %s3 = sld [smem:[#allocation0]]
  $region26: #{tpu_custom_call.1} parent=0
    _
  %s5 = ssub.s32 1, %s3
  %s6 = scalar_select 0, %s5, %s3
  $region1: #{tpu_custom_call.1} parent=0
    #allocation2 [shape = 'u8[4096]{0}', space=vmem, size = 0x1000, scoped, tag = 'input window, operand 0, single buffered']
    #allocation3 [shape = 's32[1]{0}', space=sflag, size = 0x4, scoped, tag = 'scoped memory for tpu_custom_call.1']
    #allocation4 [shape = 'u8[12288]{0}', space=vmem, size = 0x3000, scoped, tag = 'input window, operand 1, single buffered']
    #allocation5 [shape = 's32[1]{0}', space=sflag, size = 0x4, scoped, tag = 'scoped memory for tpu_custom_call.1']
    %7 = vsyncpa [#allocation3], 0
    %8 = vsyncpa [#allocation5], 0
    // Predicated region
    $region2: #{tpu_custom_call.1} parent=1 // pred_check
      _
    $region3: #{tpu_custom_call.1} parent=1 // pred_check_branch
      %10 = sbr.rel (0) target = $region5
    $region4: #{tpu_custom_call.1} parent=1 // pred_region
      %s12 = ssub.s32 128, 128
      %13 = vsyncadd [#allocation3], %s12
      %s15 = sshll.u32 [#allocation2], 4
      %s16 = int_to_ptr.vmem [resolvable:$true] %s15
      %18 = dma.hbm_to_vmem [thread:$0]  %s0, 128, %s16, [#allocation3]
    $region5: #{tpu_custom_call.1} parent=1 // pred_fallthru
      _
    // Predicated region
    $region6: #{tpu_custom_call.1} parent=1 // pred_check
      _
    $region7: #{tpu_custom_call.1} parent=1 // pred_check_branch
      %20 = sbr.rel (0) target = $region9
    $region8: #{tpu_custom_call.1} parent=1 // pred_region
      %s22 = ssub.s32 384, 384
      %23 = vsyncadd [#allocation5], %s22
      %s24 = sshll.u32 [#allocation4], 4
      %s25 = int_to_ptr.vmem [resolvable:$true] %s24
      %30 = dma.hbm_to_vmem [thread:$0]  %s1, 384, %s25, [#allocation5], 128, 128, 8
    $region9: #{tpu_custom_call.1} parent=1 // pred_fallthru
      _
    // Predicated region
    $region10: #{tpu_custom_call.1} parent=1 // pred_check
      _
    $region11: #{tpu_custom_call.1} parent=1 // pred_check_branch
      %32 = sbr.rel (0) target = $region13
    $region12: #{tpu_custom_call.1} parent=1 // pred_region
      %33 = dma.done [#allocation3], 128
    $region13: #{tpu_custom_call.1} parent=1 // pred_fallthru
      _
    // Predicated region
    $region14: #{tpu_custom_call.1} parent=1 // pred_check
      _
    $region15: #{tpu_custom_call.1} parent=1 // pred_check_branch
      %35 = sbr.rel (0) target = $region17
    $region16: #{tpu_custom_call.1} parent=1 // pred_region
      %36 = dma.done [#allocation5], 384
    $region17: #{tpu_custom_call.1} parent=1 // pred_fallthru
      _
    %v37 = vld [vmem:[#allocation2] sm:$0xff]
    %v38 = vld [vmem:[#allocation4] sm:$0xff]
    %v39 = vld [vmem:[#allocation4 + $0x8] sm:$0xff]
    %v40 = vld [vmem:[#allocation4 + $0x10] sm:$0x1]
    %vm41 = vcmask 130048
    %v43 = vsel %vm41, %v37, 0
    %45 = vmatprep.subr.mxu0 0.0
    %46 = vmatpush1.msra.mxu0 0.0
    %47 = vmatprep.subr.mxu0 0.0
    %48 = vmatpush1.msra.mxu0 0.0
    %49 = vmatprep.subr.mxu0 0.0
    %50 = vmatpush1.msra.mxu0 0.0
    %51 = vmatprep.subr.mxu0 0.0
    %52 = vmatpush1.msra.mxu0 0.0
    %53 = vmatprep.subr.mxu0 0.0
    %54 = vmatpush1.msra.mxu0 0.0
    %55 = vmatprep.subr.mxu0 0.0
    %56 = vmatpush1.msra.mxu0 0.0
    %57 = vmatprep.subr.mxu0 0.0
    %58 = vmatpush1.msra.mxu0 0.0
    %59 = vmatprep.subr.mxu0 0.0
    %60 = vmatpush1.msra.mxu0 0.0
    %61 = vmatprep.subr.mxu0 0.0
    %62 = vmatpush1.msra.mxu0 0.0
    %63 = vmatprep.subr.mxu0 0.0
    %64 = vmatpush1.msra.mxu0 0.0
    %65 = vmatprep.subr.mxu0 0.0
    %66 = vmatpush1.msra.mxu0 0.0
    %67 = vmatprep.subr.mxu0 0.0
    %68 = vmatpush1.msra.mxu0 0.0
    %69 = vmatprep.subr.mxu0 0.0
    %70 = vmatpush1.msra.mxu0 0.0
    %71 = vmatprep.subr.mxu0 0.0
    %72 = vmatpush1.msra.mxu0 0.0
    %73 = vmatprep.subr.mxu0 0.0
    %74 = vmatpush1.msra.mxu0 %v39
    %75 = vmatprep.subr.mxu0 0.0
    %76 = vmatpush1.msra.mxu0 %v38
    %77 = vmatprep.subr.mxu0 0.0
    %78 = vmatpush2.msra.mxu0 0.0
    %79 = vmatprep.subr.mxu0 0.0
    %80 = vmatpush2.msra.mxu0 0.0
    %81 = vmatprep.subr.mxu0 0.0
    %82 = vmatpush2.msra.mxu0 0.0
    %83 = vmatprep.subr.mxu0 0.0
    %84 = vmatpush2.msra.mxu0 0.0
    %85 = vmatprep.subr.mxu0 0.0
    %86 = vmatpush2.msra.mxu0 0.0
    %87 = vmatprep.subr.mxu0 0.0
    %88 = vmatpush2.msra.mxu0 0.0
    %89 = vmatprep.subr.mxu0 0.0
    %90 = vmatpush2.msra.mxu0 0.0
    %91 = vmatprep.subr.mxu0 0.0
    %92 = vmatpush2.msra.mxu0 0.0
    %93 = vmatprep.subr.mxu0 0.0
    %94 = vmatpush2.msra.mxu0 0.0
    %95 = vmatprep.subr.mxu0 0.0
    %96 = vmatpush2.msra.mxu0 0.0
    %97 = vmatprep.subr.mxu0 0.0
    %98 = vmatpush2.msra.mxu0 0.0
    %99 = vmatprep.subr.mxu0 0.0
    %100 = vmatpush2.msra.mxu0 0.0
    %101 = vmatprep.subr.mxu0 0.0
    %102 = vmatpush2.msra.mxu0 0.0
    %103 = vmatprep.subr.mxu0 0.0
    %104 = vmatpush2.msra.mxu0 0.0
    %105 = vmatprep.subr.mxu0 0.0
    %106 = vmatpush2.msra.mxu0 0.0
    %107 = vmatprep.subr.mxu0 0.0
    %108 = vmatpush2.msra.mxu0 0.0
    %109 = vmatprep.mubr.f32.mxu0 0.0
    %110 = vmatmul.mubr.f32.gmra.mxu0 %v43
    %v111 = vpop.f32.mrf.mxu0
    %v112 = vadd.f32 0.0, %v111
    %v113 = vpop.f32.mrf.mxu0
    %114 = vdwg.mxu0
    %v115 = vmax.f32 %v112, 0.0
    %v116 = vlaneseq
    %v117 = vshrl.u32 %v116, 7
    %v118 = vsub.s32 0, %v117
    %v119 = vrot.slane %v40, %v118
    %v120 = vmul.f32 %v115, %v119
    %vm121 = vcmask 162816
    %v122 = vsel %vm121, %v120, 0.0
    %123 = vadd.xlane.f32.xlu0 %v122
    %v124 = vpop.xlane.xlu0 %123
    %v125 = vrot.slane %v124, 4
    %v126 = vmax.f32 %v124, %v125
    %v127 = vrot.slane %v126, 2
    %v128 = vmax.f32 %v126, %v127
    %v129 = vrot.slane %v128, 1
    %v130 = vmax.f32 %v128, %v129
    %v131 = vsub.f32 %v124, %v130
    %v132 = vmul.f32 %v131, 1.442695
    %v133 = vpow.pop %v132
    %v134 = vrot.slane %v133, 4
    %v135 = vadd.f32 %v133, %v134
    %v136 = vrot.slane %v135, 2
    %v137 = vadd.f32 %v135, %v136
    %v138 = vrot.slane %v137, 1
    %v139 = vadd.f32 %v137, %v138
    %v140 = vrcp.pop %v139
    %v141 = vmul.f32 %v133, %v140
    %vm142 = vcmask 7168
    %143 = vst.msk [vmem:[%s2] sm:$0xff] %vm142, %v141
    // Predicated region
    $region18: #{tpu_custom_call.1} parent=1 // pred_check
      _
    $region19: #{tpu_custom_call.1} parent=1 // pred_check_branch
      %145 = sbr.rel (0) target = $region21
    $region20: #{tpu_custom_call.1} parent=1 // pred_region
      _
    $region21: #{tpu_custom_call.1} parent=1 // pred_fallthru
      _
    // Predicated region
    $region22: #{tpu_custom_call.1} parent=1 // pred_check
      _
    $region23: #{tpu_custom_call.1} parent=1 // pred_check_branch
      %147 = sbr.rel (0) target = $region25
    $region24: #{tpu_custom_call.1} parent=1 // pred_region
      _
    $region25: #{tpu_custom_call.1} parent=1 // pred_fallthru
      _
    %148 = vsyncpa [#allocation3], 1
    %149 = vsyncpa [#allocation5], 1

</llo_original>
